<compile_context>
chip_gen: v7x
topology: tpu7x:2x2x1
jax: 0.10.0
libtpu: 0.0.40
codegen_flags: <defaults>
</compile_context>

<pallas_src>
import functools
import math

import jax
import jax.numpy as jnp
from jax.experimental import pallas as pl
from jax.experimental.pallas import tpu as pltpu


# ---------------------------------------------------------------------------
# Hardware / capability queries
# ---------------------------------------------------------------------------
@functools.lru_cache(maxsize=None)
def _vmem_capacity_bytes():
    try:
        cap = int(pltpu.get_tpu_info().vmem_capacity_bytes)
        if cap > 0:
            return cap
    except Exception:
        pass
    return 64 * 1024 * 1024          # conservative fallback (v7x physical VMEM)


@functools.lru_cache(maxsize=None)
def _single_buffer_supported():
    """Probe (once) whether pipeline_mode=pl.Buffered(1) lowers on this backend."""
    if not hasattr(pl, "Buffered"):
        return False
    try:
        def k(x_ref, o_ref):
            o_ref[...] = x_ref[...] + 1.0

        spec = pl.BlockSpec((8, 128), lambda i: (0, 0),
                            pipeline_mode=pl.Buffered(1))
        y = pl.pallas_call(
            k,
            out_shape=jax.ShapeDtypeStruct((8, 128), jnp.float32),
            grid=(1,),
            in_specs=[spec],
            out_specs=pl.BlockSpec((8, 128), lambda i: (0, 0)),
        )(jnp.zeros((8, 128), jnp.float32))
        jax.block_until_ready(y)
        return bool(jnp.allclose(y, 1.0))
    except Exception:
        return False


def _const_spec(block_shape, index_map, buffered_ok):
    """BlockSpec for a grid-invariant (resident) operand; single-buffer if possible."""
    if buffered_ok:
        return pl.BlockSpec(block_shape, index_map, pipeline_mode=pl.Buffered(1))
    return pl.BlockSpec(block_shape, index_map)


# ---------------------------------------------------------------------------
# Tile planning (generation-aware)
# ---------------------------------------------------------------------------
def _plan_tiles(n_rows, d_ins, d_out, n_out, w_rows_total,
                x_it, w_it, o_it, buffered_ok):
    """Returns (row_tile, k_tile_or_None, vmem_limit_bytes)."""
    cap = _vmem_capacity_bytes()
    budget = int(cap * 0.55)                       # headroom for compiler temps
    max_tn = 1024 if cap >= (96 << 20) else 512    # bigger tiles on 128 MiB parts
    # sublane packing: 8 rows for 4-byte, 16 for 2-byte, 32 for 1-byte operands
    align = max(8, (8 * 4) // max(1, min(x_it, o_it)))

    n_x = len(d_ins)
    w_buf = 1 if buffered_ok else 2                # default is double-buffered
    resident_w = w_rows_total * d_out * w_it * w_buf
    params_bytes = 3 * d_out * 4 * 2

    # Large-weight guard (v7x): stream the weight over a K grid axis instead of
    # keeping it fully resident.
    tk = None
    if resident_w > 0.4 * cap and len(set(d_ins)) == 1:
        d_in = d_ins[0]
        for cand in (2048, 1024, 512, 256, 128):
            if d_in % cand == 0 and cand < d_in:
                tk = cand
                break
        if tk is not None:
            n_w = max(1, w_rows_total // d_in)
            resident_w = n_w * tk * d_out * w_it * 2   # streamed, double-buffered

    x_cols = sum(d_ins) if tk is None else tk * n_x
    per_row = 2 * x_it * x_cols                    # double-buffered input tiles
    per_row += 2 * o_it * n_out * d_out            # double-buffered output tiles
    per_row += 3 * 4 * n_out * d_out               # f32 epilogue intermediates
    if tk is not None:
        per_row += 4 * n_out * d_out               # f32 accumulator scratch

    avail = max(budget - resident_w - params_bytes, align * per_row)
    tn = int(min(max_tn, avail // per_row))
    tn = max(align, (tn // align) * align)
    if tn >= n_rows:
        tn = n_rows                                # full-row block: always legal

    est = resident_w + params_bytes + tn * per_row
    vmem_limit = int(max(16 << 20, min(0.85 * cap, 2 * est)))
    vmem_limit = int(min(max(vmem_limit, int(1.25 * est)), int(0.9 * cap)))
    return tn, tk, vmem_limit


# ---------------------------------------------------------------------------
# Kernel bodies:  (sum_i x_i @ w_i  or  x_j @ W) + b  ->  erf-GELU -> LayerNorm
# ---------------------------------------------------------------------------
def _make_dense_gelu_ln_kernel(n_x, shared_weight, k_tiled, eps, mxu_dtype):
    n_w = 1 if shared_weight else n_x
    n_out = n_x if shared_weight else 1
    inv_sqrt2 = 1.0 / math.sqrt(2.0)

    def epilogue(acc_f32, params_f32):
        h = acc_f32 + params_f32[0:1, :]                       # + bias
        # exact GELU: x * 0.5 * (1 + erf(x / sqrt(2)))  (matches PyTorch)
        h = h * 0.5 * (1.0 + jax.lax.erf(h * inv_sqrt2))
        # TF-style LayerNorm (eps inside sqrt), rsqrt on the EUP slot,
        # gamma folded into the normalization scale.
        u = jnp.mean(h, axis=-1, keepdims=True)
        c = h - u
        s = jnp.mean(c * c, axis=-1, keepdims=True)
        inv = jax.lax.rsqrt(s + eps)
        return c * (params_f32[1:2, :] * inv) + params_f32[2:3, :]

    def mm(x_ref, w_ref):
        x = x_ref[...]
        if mxu_dtype is not None:
            x = x.astype(mxu_dtype)        # weights are pre-cast in the wrapper
        return jnp.dot(x, w_ref[...], preferred_element_type=jnp.float32)

    def kernel(*refs):
        x_refs = refs[:n_x]
        w_refs = refs[n_x:n_x + n_w]
        p_ref = refs[n_x + n_w]
        o_refs = refs[n_x + n_w + 1:n_x + n_w + 1 + n_out]
        acc_refs = refs[n_x + n_w + 1 + n_out:]

        if not k_tiled:
            params = p_ref[...].astype(jnp.float32)
            if shared_weight:
                for x_ref, o_ref in zip(x_refs, o_refs):
                    o_ref[...] = epilogue(mm(x_ref, w_refs[0]),
                                          params).astype(o_ref.dtype)
            else:
                acc = mm(x_refs[0], w_refs[0])
                for x_ref, w_ref in zip(x_refs[1:], w_refs[1:]):
                    acc = acc + mm(x_ref, w_ref)
                o_refs[0][...] = epilogue(acc, params).astype(o_refs[0].dtype)
        else:
            k = pl.program_id(1)

            @pl.when(k == 0)
            def _init():
                for a in acc_refs:
                    a[...] = jnp.zeros_like(a)

            if shared_weight:
                for x_ref, a in zip(x_refs, acc_refs):
                    a[...] += mm(x_ref, w_refs[0])
            else:
                acc = mm(x_refs[0], w_refs[0])
                for x_ref, w_ref in zip(x_refs[1:], w_refs[1:]):
                    acc = acc + mm(x_ref, w_ref)
                acc_refs[0][...] += acc

            @pl.when(k == pl.num_programs(1) - 1)
            def _finalize():
                params = p_ref[...].astype(jnp.float32)
                for a, o_ref in zip(acc_refs, o_refs):
                    o_ref[...] = epilogue(a[...], params).astype(o_ref.dtype)

    return kernel


# ---------------------------------------------------------------------------
# Wrapper around pallas_call
#   shared_weight=True : ws == [W];  returns tuple(LN(GELU(x_j @ W + b)))
#   shared_weight=False: len(ws)==len(xs); returns LN(GELU(sum_j x_j @ W_j + b))
# ---------------------------------------------------------------------------
def fused_dense_gelu_layernorm(xs, ws, b, gamma, beta, *, eps=1e-12,
                               mxu_dtype=None, shared_weight=False,
                               buffered_ok=False):
    n_x = len(xs)
    n_w = len(ws)
    n_out = n_x if shared_weight else 1
    assert (n_w == 1) if shared_weight else (n_w == n_x)

    N = xs[0].shape[0]
    Dout = ws[0].shape[1]
    d_ins = [x.shape[1] for x in xs]
    w_rows_total = sum(w.shape[0] for w in ws)

    x_dtype = xs[0].dtype
    out_dtype = x_dtype           # keep module output dtype (bf16 possible downstream)
    x_it = jnp.dtype(x_dtype).itemsize
    w_it = jnp.dtype(ws[0].dtype).itemsize
    o_it = jnp.dtype(out_dtype).itemsize

    tn, tk, vmem_limit = _plan_tiles(N, d_ins, Dout, n_out, w_rows_total,
                                     x_it, w_it, o_it, buffered_ok)

    # bias / gamma / beta packed into one resident (3, Dout) slab (single DMA).
    params = jnp.stack([b.astype(jnp.float32),
                        gamma.astype(jnp.float32),
                        beta.astype(jnp.float32)], axis=0)

    kernel = _make_dense_gelu_ln_kernel(n_x, shared_weight, tk is not None,
                                        eps, mxu_dtype)

    out_shapes = tuple(jax.ShapeDtypeStruct((N, Dout), out_dtype)
                       for _ in range(n_out))

    if tk is None:
        grid = (pl.cdiv(N, tn),)
        x_specs = [pl.BlockSpec((tn, din), lambda i: (i, 0)) for din in d_ins]
        w_specs = [_const_spec((w.shape[0], Dout), lambda i: (0, 0), buffered_ok)
                   for w in ws]
        p_spec = _const_spec((3, Dout), lambda i: (0, 0), buffered_ok)
        out_specs = [pl.BlockSpec((tn, Dout), lambda i: (i, 0))
                     for _ in range(n_out)]
        scratch = []
        dims = ("parallel",)
    else:
        nk = d_ins[0] // tk
        grid = (pl.cdiv(N, tn), nk)
        x_specs = [pl.BlockSpec((tn, tk), lambda i, k: (i, k)) for _ in d_ins]
        # streamed weight blocks: keep default double-buffering to hide the DMA
        w_specs = [pl.BlockSpec((tk, Dout), lambda i, k: (k, 0)) for _ in ws]
        p_spec = _const_spec((3, Dout), lambda i, k: (0, 0), buffered_ok)
        out_specs = [pl.BlockSpec((tn, Dout), lambda i, k: (i, 0))
                     for _ in range(n_out)]
        scratch = [pltpu.VMEM((tn, Dout), jnp.float32) for _ in range(n_out)]
        dims = ("parallel", "arbitrary")

    matmul_cols = d_ins[0] * n_x if shared_weight else sum(d_ins)
    cost = pl.CostEstimate(
        flops=int(2 * N * matmul_cols * Dout),
        transcendentals=int(N * Dout * n_out),
        bytes_accessed=int(x_it * N * sum(d_ins) + o_it * N * Dout * n_out
                           + w_it * w_rows_total * Dout + 3 * Dout * 4),
    )

    if n_out == 1:
        out_shape_arg = out_shapes[0]
        out_specs_arg = out_specs[0]
    else:
        out_shape_arg = out_shapes
        out_specs_arg = out_specs

    return pl.pallas_call(
        kernel,
        out_shape=out_shape_arg,
        grid_spec=pltpu.PrefetchScalarGridSpec(
            num_scalar_prefetch=0,
            grid=grid,
            in_specs=x_specs + w_specs + [p_spec],
            out_specs=out_specs_arg,
            scratch_shapes=scratch,
        ),
        compiler_params=pltpu.CompilerParams(
            dimension_semantics=dims,
            vmem_limit_bytes=int(vmem_limit),
        ),
        cost_estimate=cost,
    )(*xs, *ws, params)


# ---------------------------------------------------------------------------
# Parameters + module forward
# ---------------------------------------------------------------------------
def init_params(key, hidden_size):
    """Deterministic synthetic parameters matching ABEmbedSeqIndivHead.__init__.
    The pair-head weight is stored pre-split into its VH / VL halves so the
    forward pass never slices or concatenates weights per call."""
    k1, k2, k3, k4, k5 = jax.random.split(key, 5)
    s_tok = 1.0 / math.sqrt(hidden_size)
    s_pair = 1.0 / math.sqrt(2 * hidden_size)
    H = hidden_size
    return {
        # transform_token: Linear(H, H) + LayerNorm(H)
        "tok_w": jax.random.uniform(k1, (H, H), jnp.float32, -s_tok, s_tok),
        "tok_b": jax.random.uniform(k2, (H,), jnp.float32, -s_tok, s_tok),
        "tok_gamma": jnp.ones((H,), jnp.float32),
        "tok_beta": jnp.zeros((H,), jnp.float32),
        # transform_subClassHLPair: Linear(2H, H) + LayerNorm(H), stored split
        "pair_w_vh": jax.random.uniform(k3, (H, H), jnp.float32, -s_pair, s_pair),
        "pair_w_vl": jax.random.uniform(k4, (H, H), jnp.float32, -s_pair, s_pair),
        "pair_b": jax.random.uniform(k5, (H,), jnp.float32, -s_pair, s_pair),
        "pair_gamma": jnp.ones((H,), jnp.float32),
        "pair_beta": jnp.zeros((H,), jnp.float32),
    }


@functools.partial(jax.jit, static_argnums=(3, 4, 5))
def _ab_embed_impl(params, vh, vl, eps, use_bf16_mxu, buffered_ok):
    B, S, H = vh.shape
    mxu_dtype = jnp.bfloat16 if use_bf16_mxu else None

    tok_w = params["tok_w"]
    pw_vh = params["pair_w_vh"]
    pw_vl = params["pair_w_vl"]
    if mxu_dtype is not None:
        # Pre-cast weights once in the wrapper: the resident VMEM weight block
        # is bf16 (half the footprint) and is never re-cast inside the kernel.
        tok_w = tok_w.astype(mxu_dtype)
        pw_vh = pw_vh.astype(mxu_dtype)
        pw_vl = pw_vl.astype(mxu_dtype)

    # --- transform_token on VH and VL: ONE pallas_call, shared tok_w block,
    #     two outputs.  No host-side concat, no post-kernel slices.
    vh2 = vh.reshape(B * S, H)      # free (contiguous) reshape
    vl2 = vl.reshape(B * S, H)
    h_vh2, h_vl2 = fused_dense_gelu_layernorm(
        [vh2, vl2], [tok_w],
        params["tok_b"], params["tok_gamma"], params["tok_beta"],
        eps=eps, mxu_dtype=mxu_dtype, shared_weight=True,
        buffered_ok=buffered_ok)

    # --- transform_subClassHLPair: concat(vh0, vl0) @ W == vh0 @ W_vh + vl0 @ W_vl
    #     summed in-kernel (no host-side concat of the CLS tokens).
    h_pair = fused_dense_gelu_layernorm(
        [vh[:, 0], vl[:, 0]], [pw_vh, pw_vl],
        params["pair_b"], params["pair_gamma"], params["pair_beta"],
        eps=eps, mxu_dtype=mxu_dtype, shared_weight=False,
        buffered_ok=buffered_ok)

    return h_vh2.reshape(B, S, H), h_vl2.reshape(B, S, H), h_pair


def ab_embed_seq_indiv_head(params, vh, vl, *, eps=1e-12, use_bf16_mxu=False):
    """vh, vl: (B, S, H) -> (hidden_VH (B,S,H), hidden_VL (B,S,H), hidden_pair (B,H))."""
    buffered_ok = _single_buffer_supported()     # probed once, outside jit
    return _ab_embed_impl(params, vh, vl, float(eps), bool(use_bf16_mxu),
                          buffered_ok)


# ---------------------------------------------------------------------------
# Plain-JAX reference (matches the PyTorch forward exactly)
# ---------------------------------------------------------------------------
def _reference(params, vh, vl, eps=1e-12):
    def head(x, w, b, g, be):
        h = x @ w + b
        h = h * 0.5 * (1.0 + jax.lax.erf(h / math.sqrt(2.0)))
        u = jnp.mean(h, -1, keepdims=True)
        s = jnp.mean((h - u) ** 2, -1, keepdims=True)
        return g * ((h - u) / jnp.sqrt(s + eps)) + be

    r_vh = head(vh, params["tok_w"], params["tok_b"],
                params["tok_gamma"], params["tok_beta"])
    r_vl = head(vl, params["tok_w"], params["tok_b"],
                params["tok_gamma"], params["tok_beta"])
    pair_w = jnp.concatenate([params["pair_w_vh"], params["pair_w_vl"]], axis=0)
    r_pair = head(jnp.concatenate([vh[:, 0], vl[:, 0]], axis=1),
                  pair_w, params["pair_b"],
                  params["pair_gamma"], params["pair_beta"])
    return r_vh, r_vl, r_pair


if __name__ == "__main__":
    B, S, H = 2, 8, 32
    key = jax.random.PRNGKey(0)
    k_params, k_vh, k_vl = jax.random.split(key, 3)

    params = init_params(k_params, H)
    vh = jax.random.normal(k_vh, (B, S, H), jnp.float32)
    vl = jax.random.normal(k_vl, (B, S, H), jnp.float32)

    r_vh, r_vl, r_pair = _reference(params, vh, vl)

    # f32 MXU path (exact-match vs reference)
    h_vh, h_vl, h_pair = ab_embed_seq_indiv_head(params, vh, vl)
    jax.block_until_ready((h_vh, h_vl, h_pair))
    assert h_vh.shape == (B, S, H) and h_vl.shape == (B, S, H) and h_pair.shape == (B, H)
    assert jnp.allclose(h_vh, r_vh, atol=1e-4, rtol=1e-4)
    assert jnp.allclose(h_vl, r_vl, atol=1e-4, rtol=1e-4)
    assert jnp.allclose(h_pair, r_pair, atol=1e-4, rtol=1e-4)

    # bf16-operand MXU path (pre-cast weights, f32 accumulation + f32 epilogue)
    # — recommended production configuration on all generations; looser tolerance.
    b_vh, b_vl, b_pair = ab_embed_seq_indiv_head(params, vh, vl, use_bf16_mxu=True)
    jax.block_until_ready((b_vh, b_vl, b_pair))
    assert jnp.allclose(b_vh, r_vh, atol=1e-1, rtol=1e-1)
    assert jnp.allclose(b_vl, r_vl, atol=1e-1, rtol=1e-1)
    assert jnp.allclose(b_pair, r_pair, atol=1e-1, rtol=1e-1)

    print("KERNEL_OK")
</pallas_src>

<mosaic_0001>
module attributes {stable_mosaic.version = 11 : i64} {
  func.func @k(%arg0: i32, %arg1: memref<8x128xf32, #tpu.memory_space<vmem>>, %arg2: memref<8x128xf32, #tpu.memory_space<vmem>>) attributes {dimension_semantics = [#tpu.dimension_semantics<arbitrary>], iteration_bounds = array<i64: 1>, scalar_prefetch = 0 : i64, scratch_operands = 0 : i64, tpu.core_type = #tpu.core_type<tc>, window_params = [{pipeline_mode = #tpu.pipeline_mode<synchronous>, transform_indices = @transform_0, window_bounds = array<i64: 8, 128>}, {pipeline_mode = #tpu.pipeline_mode<synchronous>, transform_indices = @transform_1, window_bounds = array<i64: 8, 128>}]} {
    %c0 = arith.constant 0 : index
    %c0_0 = arith.constant 0 : index
    %0 = vector.load %arg1[%c0, %c0_0] : memref<8x128xf32, #tpu.memory_space<vmem>>, vector<8x128xf32>
    %cst = arith.constant 1.000000e+00 : f32
    %1 = vector.broadcast %cst : f32 to vector<8x128xf32>
    %2 = arith.addf %0, %1 : vector<8x128xf32>
    %c0_1 = arith.constant 0 : index
    %c0_2 = arith.constant 0 : index
    %3 = vector.load %arg2[%c0_1, %c0_2] : memref<8x128xf32, #tpu.memory_space<vmem>>, vector<8x128xf32>
    tpu.vector_store %arg2[%c0_1, %c0_2], %2 {strides = array<i32>} : memref<8x128xf32, #tpu.memory_space<vmem>>, vector<8x128xf32>,
    return
  }
  func.func @transform_0(%arg0: i32) -> (i32, i32) {
    %c0_i32 = arith.constant 0 : i32
    %c0_i32_0 = arith.constant 0 : i32
    %c0_i32_1 = arith.constant 0 : i32
    return %c0_i32, %c0_i32_0 : i32, i32
  }
  func.func @transform_1(%arg0: i32) -> (i32, i32) {
    %c0_i32 = arith.constant 0 : i32
    %c0_i32_0 = arith.constant 0 : i32
    %c0_i32_1 = arith.constant 0 : i32
    return %c0_i32, %c0_i32_0 : i32, i32
  }
}

module attributes {stable_mosaic.version = 11 : i64} {
  func.func @kernel(%arg0: i32, %arg1: memref<2x32xf32, #tpu.memory_space<vmem>>, %arg2: memref<2x32xf32, #tpu.memory_space<vmem>>, %arg3: memref<32x32xf32, #tpu.memory_space<vmem>>, %arg4: memref<32x32xf32, #tpu.memory_space<vmem>>, %arg5: memref<3x32xf32, #tpu.memory_space<vmem>>, %arg6: memref<2x32xf32, #tpu.memory_space<vmem>>) attributes {dimension_semantics = [#tpu.dimension_semantics<parallel>], iteration_bounds = array<i64: 1>, scalar_prefetch = 0 : i64, scratch_operands = 0 : i64, tpu.core_type = #tpu.core_type<tc>, window_params = [{transform_indices = @transform_0, window_bounds = array<i64: 2, 32>}, {transform_indices = @transform_1, window_bounds = array<i64: 2, 32>}, {pipeline_mode = #tpu.pipeline_mode<synchronous>, transform_indices = @transform_2, window_bounds = array<i64: 32, 32>}, {pipeline_mode = #tpu.pipeline_mode<synchronous>, transform_indices = @transform_3, window_bounds = array<i64: 32, 32>}, {pipeline_mode = #tpu.pipeline_mode<synchronous>, transform_indices = @transform_4, window_bounds = array<i64: 3, 32>}, {transform_indices = @transform_5, window_bounds = array<i64: 2, 32>}]} {
    %c0 = arith.constant 0 : index
    %c0_0 = arith.constant 0 : index
    %0 = vector.load %arg5[%c0, %c0_0] : memref<3x32xf32, #tpu.memory_space<vmem>>, vector<3x32xf32>
    %c0_1 = arith.constant 0 : index
    %c0_2 = arith.constant 0 : index
    %1 = vector.load %arg1[%c0_1, %c0_2] : memref<2x32xf32, #tpu.memory_space<vmem>>, vector<2x32xf32>
    %c0_3 = arith.constant 0 : index
    %c0_4 = arith.constant 0 : index
    %2 = vector.load %arg3[%c0_3, %c0_4] : memref<32x32xf32, #tpu.memory_space<vmem>>, vector<32x32xf32>
    %cst = arith.constant dense<0.000000e+00> : vector<2x32xf32>
    %3 = tpu.matmul %1, %2, %cst {dimension_numbers = #tpu.dot_dimension_numbers<[1], [0], [0], [1], [0, 0, 1, 1], [], []>} : vector<2x32xf32>, vector<32x32xf32>, vector<2x32xf32> -> vector<2x32xf32>
    %c0_5 = arith.constant 0 : index
    %c0_6 = arith.constant 0 : index
    %4 = vector.load %arg2[%c0_5, %c0_6] : memref<2x32xf32, #tpu.memory_space<vmem>>, vector<2x32xf32>
    %c0_7 = arith.constant 0 : index
    %c0_8 = arith.constant 0 : index
    %5 = vector.load %arg4[%c0_7, %c0_8] : memref<32x32xf32, #tpu.memory_space<vmem>>, vector<32x32xf32>
    %cst_9 = arith.constant dense<0.000000e+00> : vector<2x32xf32>
    %6 = tpu.matmul %4, %5, %cst_9 {dimension_numbers = #tpu.dot_dimension_numbers<[1], [0], [0], [1], [0, 0, 1, 1], [], []>} : vector<2x32xf32>, vector<32x32xf32>, vector<2x32xf32> -> vector<2x32xf32>
    %7 = arith.addf %3, %6 : vector<2x32xf32>
    %8 = vector.extract_strided_slice %0 {offsets = [0, 0], sizes = [1, 32], strides = [1, 1]} : vector<3x32xf32> to vector<1x32xf32>
    %9 = vector.broadcast %8 : vector<1x32xf32> to vector<2x32xf32>
    %10 = arith.addf %7, %9 : vector<2x32xf32>
    %cst_10 = arith.constant 5.000000e-01 : f32
    %11 = vector.broadcast %cst_10 : f32 to vector<2x32xf32>
    %12 = arith.mulf %10, %11 : vector<2x32xf32>
    %cst_11 = arith.constant 0.707106769 : f32
    %13 = vector.broadcast %cst_11 : f32 to vector<2x32xf32>
    %14 = arith.mulf %10, %13 : vector<2x32xf32>
    %15 = math.erf %14 : vector<2x32xf32>
    %cst_12 = arith.constant 1.000000e+00 : f32
    %16 = vector.broadcast %cst_12 : f32 to vector<2x32xf32>
    %17 = arith.addf %16, %15 : vector<2x32xf32>
    %18 = arith.mulf %12, %17 : vector<2x32xf32>
    %cst_13 = arith.constant dense<0.000000e+00> : vector<2xf32>
    %19 = vector.multi_reduction <add>, %18, %cst_13 [1] : vector<2x32xf32> to vector<2xf32>
    %20 = vector.shape_cast %19 : vector<2xf32> to vector<2x1xf32>
    %cst_14 = arith.constant 3.200000e+01 : f32
    %21 = vector.broadcast %cst_14 : f32 to vector<2x1xf32>
    %22 = arith.divf %20, %21 : vector<2x1xf32>
    %23 = vector.broadcast %22 : vector<2x1xf32> to vector<2x32xf32>
    %24 = arith.subf %18, %23 : vector<2x32xf32>
    %25 = arith.mulf %24, %24 : vector<2x32xf32>
    %cst_15 = arith.constant dense<0.000000e+00> : vector<2xf32>
    %26 = vector.multi_reduction <add>, %25, %cst_15 [1] : vector<2x32xf32> to vector<2xf32>
    %27 = vector.shape_cast %26 : vector<2xf32> to vector<2x1xf32>
    %cst_16 = arith.constant 3.200000e+01 : f32
    %28 = vector.broadcast %cst_16 : f32 to vector<2x1xf32>
    %29 = arith.divf %27, %28 : vector<2x1xf32>
    %cst_17 = arith.constant 9.99999996E-13 : f32
    %30 = vector.broadcast %cst_17 : f32 to vector<2x1xf32>
    %31 = arith.addf %29, %30 : vector<2x1xf32>
    %32 = math.rsqrt %31 : vector<2x1xf32>
    %33 = vector.extract_strided_slice %0 {offsets = [1, 0], sizes = [1, 32], strides = [1, 1]} : vector<3x32xf32> to vector<1x32xf32>
    %34 = vector.broadcast %33 : vector<1x32xf32> to vector<2x32xf32>
    %35 = vector.broadcast %32 : vector<2x1xf32> to vector<2x32xf32>
    %36 = arith.mulf %34, %35 : vector<2x32xf32>
    %37 = arith.mulf %24, %36 : vector<2x32xf32>
    %38 = vector.extract_strided_slice %0 {offsets = [2, 0], sizes = [1, 32], strides = [1, 1]} : vector<3x32xf32> to vector<1x32xf32>
    %39 = vector.broadcast %38 : vector<1x32xf32> to vector<2x32xf32>
    %40 = arith.addf %37, %39 : vector<2x32xf32>
    %c0_18 = arith.constant 0 : index
    %c0_19 = arith.constant 0 : index
    %41 = vector.load %arg6[%c0_18, %c0_19] : memref<2x32xf32, #tpu.memory_space<vmem>>, vector<2x32xf32>
    tpu.vector_store %arg6[%c0_18, %c0_19], %40 {strides = array<i32>} : memref<2x32xf32, #tpu.memory_space<vmem>>, vector<2x32xf32>,
    return
  }
  func.func @transform_0(%arg0: i32) -> (i32, i32) {
    %c0_i32 = arith.constant 0 : i32
    %c0_i32_0 = arith.constant 0 : i32
    return %arg0, %c0_i32 : i32, i32
  }
  func.func @transform_1(%arg0: i32) -> (i32, i32) {
    %c0_i32 = arith.constant 0 : i32
    %c0_i32_0 = arith.constant 0 : i32
    return %arg0, %c0_i32 : i32, i32
  }
  func.func @transform_2(%arg0: i32) -> (i32, i32) {
    %c0_i32 = arith.constant 0 : i32
    %c0_i32_0 = arith.constant 0 : i32
    %c0_i32_1 = arith.constant 0 : i32
    return %c0_i32, %c0_i32_0 : i32, i32
  }
  func.func @transform_3(%arg0: i32) -> (i32, i32) {
    %c0_i32 = arith.constant 0 : i32
    %c0_i32_0 = arith.constant 0 : i32
    %c0_i32_1 = arith.constant 0 : i32
    return %c0_i32, %c0_i32_0 : i32, i32
  }
  func.func @transform_4(%arg0: i32) -> (i32, i32) {
    %c0_i32 = arith.constant 0 : i32
    %c0_i32_0 = arith.constant 0 : i32
    %c0_i32_1 = arith.constant 0 : i32
    return %c0_i32, %c0_i32_0 : i32, i32
  }
  func.func @transform_5(%arg0: i32) -> (i32, i32) {
    %c0_i32 = arith.constant 0 : i32
    %c0_i32_0 = arith.constant 0 : i32
    return %arg0, %c0_i32 : i32, i32
  }
}

module attributes {stable_mosaic.version = 11 : i64} {
  func.func @kernel(%arg0: i32, %arg1: memref<16x32xf32, #tpu.memory_space<vmem>>, %arg2: memref<16x32xf32, #tpu.memory_space<vmem>>, %arg3: memref<32x32xf32, #tpu.memory_space<vmem>>, %arg4: memref<3x32xf32, #tpu.memory_space<vmem>>, %arg5: memref<16x32xf32, #tpu.memory_space<vmem>>, %arg6: memref<16x32xf32, #tpu.memory_space<vmem>>) attributes {dimension_semantics = [#tpu.dimension_semantics<parallel>], iteration_bounds = array<i64: 1>, scalar_prefetch = 0 : i64, scratch_operands = 0 : i64, tpu.core_type = #tpu.core_type<tc>, window_params = [{transform_indices = @transform_0, window_bounds = array<i64: 16, 32>}, {transform_indices = @transform_1, window_bounds = array<i64: 16, 32>}, {pipeline_mode = #tpu.pipeline_mode<synchronous>, transform_indices = @transform_2, window_bounds = array<i64: 32, 32>}, {pipeline_mode = #tpu.pipeline_mode<synchronous>, transform_indices = @transform_3, window_bounds = array<i64: 3, 32>}, {transform_indices = @transform_4, window_bounds = array<i64: 16, 32>}, {transform_indices = @transform_5, window_bounds = array<i64: 16, 32>}]} {
    %c0 = arith.constant 0 : index
    %c0_0 = arith.constant 0 : index
    %0 = vector.load %arg4[%c0, %c0_0] : memref<3x32xf32, #tpu.memory_space<vmem>>, vector<3x32xf32>
    %c0_1 = arith.constant 0 : index
    %c0_2 = arith.constant 0 : index
    %1 = vector.load %arg1[%c0_1, %c0_2] : memref<16x32xf32, #tpu.memory_space<vmem>>, vector<16x32xf32>
    %c0_3 = arith.constant 0 : index
    %c0_4 = arith.constant 0 : index
    %2 = vector.load %arg3[%c0_3, %c0_4] : memref<32x32xf32, #tpu.memory_space<vmem>>, vector<32x32xf32>
    %cst = arith.constant dense<0.000000e+00> : vector<16x32xf32>
    %3 = tpu.matmul %1, %2, %cst {dimension_numbers = #tpu.dot_dimension_numbers<[1], [0], [0], [1], [0, 0, 1, 1], [], []>} : vector<16x32xf32>, vector<32x32xf32>, vector<16x32xf32> -> vector<16x32xf32>
    %4 = vector.extract_strided_slice %0 {offsets = [0, 0], sizes = [1, 32], strides = [1, 1]} : vector<3x32xf32> to vector<1x32xf32>
    %5 = vector.broadcast %4 : vector<1x32xf32> to vector<16x32xf32>
    %6 = arith.addf %3, %5 : vector<16x32xf32>
    %cst_5 = arith.constant 5.000000e-01 : f32
    %7 = vector.broadcast %cst_5 : f32 to vector<16x32xf32>
    %8 = arith.mulf %6, %7 : vector<16x32xf32>
    %cst_6 = arith.constant 0.707106769 : f32
    %9 = vector.broadcast %cst_6 : f32 to vector<16x32xf32>
    %10 = arith.mulf %6, %9 : vector<16x32xf32>
    %11 = math.erf %10 : vector<16x32xf32>
    %cst_7 = arith.constant 1.000000e+00 : f32
    %12 = vector.broadcast %cst_7 : f32 to vector<16x32xf32>
    %13 = arith.addf %12, %11 : vector<16x32xf32>
    %14 = arith.mulf %8, %13 : vector<16x32xf32>
    %cst_8 = arith.constant dense<0.000000e+00> : vector<16xf32>
    %15 = vector.multi_reduction <add>, %14, %cst_8 [1] : vector<16x32xf32> to vector<16xf32>
    %16 = vector.shape_cast %15 : vector<16xf32> to vector<16x1xf32>
    %cst_9 = arith.constant 3.200000e+01 : f32
    %17 = vector.broadcast %cst_9 : f32 to vector<16x1xf32>
    %18 = arith.divf %16, %17 : vector<16x1xf32>
    %19 = vector.broadcast %18 : vector<16x1xf32> to vector<16x32xf32>
    %20 = arith.subf %14, %19 : vector<16x32xf32>
    %21 = arith.mulf %20, %20 : vector<16x32xf32>
    %cst_10 = arith.constant dense<0.000000e+00> : vector<16xf32>
    %22 = vector.multi_reduction <add>, %21, %cst_10 [1] : vector<16x32xf32> to vector<16xf32>
    %23 = vector.shape_cast %22 : vector<16xf32> to vector<16x1xf32>
    %cst_11 = arith.constant 3.200000e+01 : f32
    %24 = vector.broadcast %cst_11 : f32 to vector<16x1xf32>
    %25 = arith.divf %23, %24 : vector<16x1xf32>
    %cst_12 = arith.constant 9.99999996E-13 : f32
    %26 = vector.broadcast %cst_12 : f32 to vector<16x1xf32>
    %27 = arith.addf %25, %26 : vector<16x1xf32>
    %28 = math.rsqrt %27 : vector<16x1xf32>
    %29 = vector.extract_strided_slice %0 {offsets = [1, 0], sizes = [1, 32], strides = [1, 1]} : vector<3x32xf32> to vector<1x32xf32>
    %30 = vector.broadcast %29 : vector<1x32xf32> to vector<16x32xf32>
    %31 = vector.broadcast %28 : vector<16x1xf32> to vector<16x32xf32>
    %32 = arith.mulf %30, %31 : vector<16x32xf32>
    %33 = arith.mulf %20, %32 : vector<16x32xf32>
    %34 = vector.extract_strided_slice %0 {offsets = [2, 0], sizes = [1, 32], strides = [1, 1]} : vector<3x32xf32> to vector<1x32xf32>
    %35 = vector.broadcast %34 : vector<1x32xf32> to vector<16x32xf32>
    %36 = arith.addf %33, %35 : vector<16x32xf32>
    %c0_13 = arith.constant 0 : index
    %c0_14 = arith.constant 0 : index
    %37 = vector.load %arg5[%c0_13, %c0_14] : memref<16x32xf32, #tpu.memory_space<vmem>>, vector<16x32xf32>
    tpu.vector_store %arg5[%c0_13, %c0_14], %36 {strides = array<i32>} : memref<16x32xf32, #tpu.memory_space<vmem>>, vector<16x32xf32>,
    %c0_15 = arith.constant 0 : index
    %c0_16 = arith.constant 0 : index
    %38 = vector.load %arg2[%c0_15, %c0_16] : memref<16x32xf32, #tpu.memory_space<vmem>>, vector<16x32xf32>
    %c0_17 = arith.constant 0 : index
    %c0_18 = arith.constant 0 : index
    %39 = vector.load %arg3[%c0_17, %c0_18] : memref<32x32xf32, #tpu.memory_space<vmem>>, vector<32x32xf32>
    %cst_19 = arith.constant dense<0.000000e+00> : vector<16x32xf32>
    %40 = tpu.matmul %38, %39, %cst_19 {dimension_numbers = #tpu.dot_dimension_numbers<[1], [0], [0], [1], [0, 0, 1, 1], [], []>} : vector<16x32xf32>, vector<32x32xf32>, vector<16x32xf32> -> vector<16x32xf32>
    %41 = vector.extract_strided_slice %0 {offsets = [0, 0], sizes = [1, 32], strides = [1, 1]} : vector<3x32xf32> to vector<1x32xf32>
    %42 = vector.broadcast %41 : vector<1x32xf32> to vector<16x32xf32>
    %43 = arith.addf %40, %42 : vector<16x32xf32>
    %cst_20 = arith.constant 5.000000e-01 : f32
    %44 = vector.broadcast %cst_20 : f32 to vector<16x32xf32>
    %45 = arith.mulf %43, %44 : vector<16x32xf32>
    %cst_21 = arith.constant 0.707106769 : f32
    %46 = vector.broadcast %cst_21 : f32 to vector<16x32xf32>
    %47 = arith.mulf %43, %46 : vector<16x32xf32>
    %48 = math.erf %47 : vector<16x32xf32>
    %cst_22 = arith.constant 1.000000e+00 : f32
    %49 = vector.broadcast %cst_22 : f32 to vector<16x32xf32>
    %50 = arith.addf %49, %48 : vector<16x32xf32>
    %51 = arith.mulf %45, %50 : vector<16x32xf32>
    %cst_23 = arith.constant dense<0.000000e+00> : vector<16xf32>
    %52 = vector.multi_reduction <add>, %51, %cst_23 [1] : vector<16x32xf32> to vector<16xf32>
    %53 = vector.shape_cast %52 : vector<16xf32> to vector<16x1xf32>
    %cst_24 = arith.constant 3.200000e+01 : f32
    %54 = vector.broadcast %cst_24 : f32 to vector<16x1xf32>
    %55 = arith.divf %53, %54 : vector<16x1xf32>
    %56 = vector.broadcast %55 : vector<16x1xf32> to vector<16x32xf32>
    %57 = arith.subf %51, %56 : vector<16x32xf32>
    %58 = arith.mulf %57, %57 : vector<16x32xf32>
    %cst_25 = arith.constant dense<0.000000e+00> : vector<16xf32>
    %59 = vector.multi_reduction <add>, %58, %cst_25 [1] : vector<16x32xf32> to vector<16xf32>
    %60 = vector.shape_cast %59 : vector<16xf32> to vector<16x1xf32>
    %cst_26 = arith.constant 3.200000e+01 : f32
    %61 = vector.broadcast %cst_26 : f32 to vector<16x1xf32>
    %62 = arith.divf %60, %61 : vector<16x1xf32>
    %cst_27 = arith.constant 9.99999996E-13 : f32
    %63 = vector.broadcast %cst_27 : f32 to vector<16x1xf32>
    %64 = arith.addf %62, %63 : vector<16x1xf32>
    %65 = math.rsqrt %64 : vector<16x1xf32>
    %66 = vector.extract_strided_slice %0 {offsets = [1, 0], sizes = [1, 32], strides = [1, 1]} : vector<3x32xf32> to vector<1x32xf32>
    %67 = vector.broadcast %66 : vector<1x32xf32> to vector<16x32xf32>
    %68 = vector.broadcast %65 : vector<16x1xf32> to vector<16x32xf32>
    %69 = arith.mulf %67, %68 : vector<16x32xf32>
    %70 = arith.mulf %57, %69 : vector<16x32xf32>
    %71 = vector.extract_strided_slice %0 {offsets = [2, 0], sizes = [1, 32], strides = [1, 1]} : vector<3x32xf32> to vector<1x32xf32>
    %72 = vector.broadcast %71 : vector<1x32xf32> to vector<16x32xf32>
    %73 = arith.addf %70, %72 : vector<16x32xf32>
    %c0_28 = arith.constant 0 : index
    %c0_29 = arith.constant 0 : index
    %74 = vector.load %arg6[%c0_28, %c0_29] : memref<16x32xf32, #tpu.memory_space<vmem>>, vector<16x32xf32>
    tpu.vector_store %arg6[%c0_28, %c0_29], %73 {strides = array<i32>} : memref<16x32xf32, #tpu.memory_space<vmem>>, vector<16x32xf32>,
    return
  }
  func.func @transform_0(%arg0: i32) -> (i32, i32) {
    %c0_i32 = arith.constant 0 : i32
    %c0_i32_0 = arith.constant 0 : i32
    return %arg0, %c0_i32 : i32, i32
  }
  func.func @transform_1(%arg0: i32) -> (i32, i32) {
    %c0_i32 = arith.constant 0 : i32
    %c0_i32_0 = arith.constant 0 : i32
    return %arg0, %c0_i32 : i32, i32
  }
  func.func @transform_2(%arg0: i32) -> (i32, i32) {
    %c0_i32 = arith.constant 0 : i32
    %c0_i32_0 = arith.constant 0 : i32
    %c0_i32_1 = arith.constant 0 : i32
    return %c0_i32, %c0_i32_0 : i32, i32
  }
  func.func @transform_3(%arg0: i32) -> (i32, i32) {
    %c0_i32 = arith.constant 0 : i32
    %c0_i32_0 = arith.constant 0 : i32
    %c0_i32_1 = arith.constant 0 : i32
    return %c0_i32, %c0_i32_0 : i32, i32
  }
  func.func @transform_4(%arg0: i32) -> (i32, i32) {
    %c0_i32 = arith.constant 0 : i32
    %c0_i32_0 = arith.constant 0 : i32
    return %arg0, %c0_i32 : i32, i32
  }
  func.func @transform_5(%arg0: i32) -> (i32, i32) {
    %c0_i32 = arith.constant 0 : i32
    %c0_i32_0 = arith.constant 0 : i32
    return %arg0, %c0_i32 : i32, i32
  }
}

</mosaic_0001>

<llo_original>
// kernel: tpu_custom_call.1
$region0: #{tpu_custom_call.1}
  #allocation0 [shape = 'u32[]', space=smem, size = 0x4, offset = 0x4, fixed_abs, tag = 'smem constant byte address 0x4 - core index']
  #allocation1 [shape = 'u32[144,128]{1,0:T(1,128)}', space=vmem, size = 0x12000, scoped, tag = 'internal scratch']
  %s0 = inlined_call_operand.hbm [shape: f32[8,128], index: 0, kind: input, shape index: {}]
  %s1 = inlined_call_operand.hbm [shape: f32[8,128], index: 1, kind: output, shape index: {}]
  %s2 = sld [smem:[#allocation0]]
  $region18: #{tpu_custom_call.1} parent=0
    _
  %s4 = ssub.s32 1, %s2
  %s5 = scalar_select 0, %s4, %s2
  $region1: #{tpu_custom_call.1} parent=0
    #allocation2 [shape = 'u8[4096]{0}', space=vmem, size = 0x1000, scoped, tag = 'input window, operand 0, single buffered']
    #allocation3 [shape = 's32[1]{0}', space=sflag, size = 0x4, scoped, tag = 'scoped memory for tpu_custom_call.1']
    #allocation4 [shape = 's32[1]{0}', space=sflag, size = 0x4, scoped, tag = 'scoped memory for tpu_custom_call.1']
    #allocation5 [shape = 'u8[4096]{0}', space=vmem, size = 0x1000, scoped, tag = 'output window, operand 0, single buffered']
    %6 = vsyncpa [#allocation3], 0
    %7 = vsyncpa [#allocation4], 0
    // Predicated region
    $region2: #{tpu_custom_call.1} parent=1 // pred_check
      _
    $region3: #{tpu_custom_call.1} parent=1 // pred_check_branch
      %9 = sbr.rel (0) target = $region5
    $region4: #{tpu_custom_call.1} parent=1 // pred_region
      %s11 = ssub.s32 128, 128
      %12 = vsyncadd [#allocation3], %s11
      %s14 = sshll.u32 [#allocation2], 4
      %s15 = int_to_ptr.vmem [resolvable:$true] %s14
      %17 = dma.hbm_to_vmem [thread:$0]  %s0, 128, %s15, [#allocation3]
    $region5: #{tpu_custom_call.1} parent=1 // pred_fallthru
      _
    // Predicated region
    $region6: #{tpu_custom_call.1} parent=1 // pred_check
      _
    $region7: #{tpu_custom_call.1} parent=1 // pred_check_branch
      %19 = sbr.rel (0) target = $region9
    $region8: #{tpu_custom_call.1} parent=1 // pred_region
      %20 = dma.done [#allocation3], 128
    $region9: #{tpu_custom_call.1} parent=1 // pred_fallthru
      _
    %v21 = vld [vmem:[#allocation2] sm:$0xff]
    %v22 = vadd.f32 %v21, 1.0
    %23 = vst [vmem:[#allocation5] sm:$0xff] %v22
    // Predicated region
    $region10: #{tpu_custom_call.1} parent=1 // pred_check
      _
    $region11: #{tpu_custom_call.1} parent=1 // pred_check_branch
      %25 = sbr.rel (0) target = $region13
    $region12: #{tpu_custom_call.1} parent=1 // pred_region
      %s27 = ssub.s32 128, 128
      %28 = vsyncadd [#allocation4], %s27
      %s30 = sshll.u32 [#allocation5], 4
      %s31 = int_to_ptr.vmem [resolvable:$true] %s30
      %33 = dma.vmem_to_hbm [thread:$0]  %s31, 128, %s1, [#allocation4]
    $region13: #{tpu_custom_call.1} parent=1 // pred_fallthru
      _
    // Predicated region
    $region14: #{tpu_custom_call.1} parent=1 // pred_check
      _
    $region15: #{tpu_custom_call.1} parent=1 // pred_check_branch
      %35 = sbr.rel (0) target = $region17
    $region16: #{tpu_custom_call.1} parent=1 // pred_region
      %36 = dma.done [#allocation4], 128
    $region17: #{tpu_custom_call.1} parent=1 // pred_fallthru
      _
    %37 = vsyncpa [#allocation3], 1
    %38 = vsyncpa [#allocation4], 1

// kernel: _ab_embed_impl.3
$region0: #{_ab_embed_impl.3}
  #allocation0 [shape = 'u32[]', space=smem, size = 0x4, offset = 0x4, fixed_abs, tag = 'smem constant byte address 0x4 - core index']
  #allocation1 [shape = 'u32[144,128]{1,0:T(1,128)}', space=vmem, size = 0x12000, scoped, tag = 'internal scratch']
  %s0 = inlined_call_operand.vmem [shape: f32[2,32], index: 0, kind: input, shape index: {}]
  %s1 = inlined_call_operand.vmem [shape: f32[2,32], index: 1, kind: input, shape index: {}]
  %s2 = inlined_call_operand.vmem [shape: f32[32,32], index: 2, kind: input, shape index: {}]
  %s3 = inlined_call_operand.vmem [shape: f32[32,32], index: 3, kind: input, shape index: {}]
  %s4 = inlined_call_operand.vmem [shape: f32[3,32], index: 4, kind: input, shape index: {}]
  %s5 = inlined_call_operand.hbm [shape: f32[2,32], index: 5, kind: output, shape index: {}]
  %s6 = sld [smem:[#allocation0]]
  $region30: #{_ab_embed_impl.3} parent=0
    _
  %s8 = ssub.s32 1, %s6
  %s9 = scalar_select 0, %s8, %s6
  $region1: #{_ab_embed_impl.3} parent=0
    #allocation2 [shape = 'u8[1024]{0}', space=vmem, size = 0x400, scoped, tag = 'output window, operand 0, single buffered']
    #allocation3 [shape = 's32[1]{0}', space=sflag, size = 0x4, scoped, tag = 'scoped memory for _ab_embed_impl.3']
    %10 = vsyncpa [#allocation3], 0
    // Predicated region
    $region2: #{_ab_embed_impl.3} parent=1 // pred_check
      _
    $region3: #{_ab_embed_impl.3} parent=1 // pred_check_branch
      %12 = sbr.rel (0) target = $region5
    $region4: #{_ab_embed_impl.3} parent=1 // pred_region
      _
    $region5: #{_ab_embed_impl.3} parent=1 // pred_fallthru
      _
    // Predicated region
    $region6: #{_ab_embed_impl.3} parent=1 // pred_check
      _
    $region7: #{_ab_embed_impl.3} parent=1 // pred_check_branch
      %14 = sbr.rel (0) target = $region9
    $region8: #{_ab_embed_impl.3} parent=1 // pred_region
      _
    $region9: #{_ab_embed_impl.3} parent=1 // pred_fallthru
      _
    // Predicated region
    $region10: #{_ab_embed_impl.3} parent=1 // pred_check
      _
    $region11: #{_ab_embed_impl.3} parent=1 // pred_check_branch
      %16 = sbr.rel (0) target = $region13
    $region12: #{_ab_embed_impl.3} parent=1 // pred_region
      _
    $region13: #{_ab_embed_impl.3} parent=1 // pred_fallthru
      _
    // Predicated region
    $region14: #{_ab_embed_impl.3} parent=1 // pred_check
      _
    $region15: #{_ab_embed_impl.3} parent=1 // pred_check_branch
      %18 = sbr.rel (0) target = $region17
    $region16: #{_ab_embed_impl.3} parent=1 // pred_region
      _
    $region17: #{_ab_embed_impl.3} parent=1 // pred_fallthru
      _
    // Predicated region
    $region18: #{_ab_embed_impl.3} parent=1 // pred_check
      _
    $region19: #{_ab_embed_impl.3} parent=1 // pred_check_branch
      %20 = sbr.rel (0) target = $region21
    $region20: #{_ab_embed_impl.3} parent=1 // pred_region
      _
    $region21: #{_ab_embed_impl.3} parent=1 // pred_fallthru
      _
    %v21 = vld [vmem:[%s4] sm:$0x7]
    %v22 = vld [vmem:[%s0] sm:$0x3]
    %v23 = vld [vmem:[%s2] sm:$0xff]
    %v24 = vld [vmem:[%s2 + $0x8] sm:$0xff]
    %v25 = vld [vmem:[%s2 + $0x10] sm:$0xff]
    %v26 = vld [vmem:[%s2 + $0x18] sm:$0xff]
    %v27 = vld [vmem:[%s1] sm:$0x3]
    %v28 = vld [vmem:[%s3] sm:$0xff]
    %v29 = vld [vmem:[%s3 + $0x8] sm:$0xff]
    %v30 = vld [vmem:[%s3 + $0x10] sm:$0xff]
    %v31 = vld [vmem:[%s3 + $0x18] sm:$0xff]
    %vm32 = vcmask 261120
    %v34 = vsel %vm32, %v27, 0
    %36 = vmatprep.subr.mxu0 0.0
    %37 = vmatpush1.msra.mxu0 %v28
    %38 = vmatprep.subr.mxu0 0.0
    %39 = vmatpush1.msra.mxu0 %v29
    %40 = vmatprep.subr.mxu0 0.0
    %41 = vmatpush1.msra.mxu0 %v30
    %42 = vmatprep.subr.mxu0 0.0
    %43 = vmatpush1.msra.mxu0 %v31
    %44 = vmatprep.subr.mxu0 0.0
    %45 = vmatpush1.msra.mxu0 0.0
    %46 = vmatprep.subr.mxu0 0.0
    %47 = vmatpush1.msra.mxu0 0.0
    %48 = vmatprep.subr.mxu0 0.0
    %49 = vmatpush1.msra.mxu0 0.0
    %50 = vmatprep.subr.mxu0 0.0
    %51 = vmatpush1.msra.mxu0 0.0
    %52 = vmatprep.subr.mxu0 0.0
    %53 = vmatpush1.msra.mxu0 0.0
    %54 = vmatprep.subr.mxu0 0.0
    %55 = vmatpush1.msra.mxu0 0.0
    %56 = vmatprep.subr.mxu0 0.0
    %57 = vmatpush1.msra.mxu0 0.0
    %58 = vmatprep.subr.mxu0 0.0
    %59 = vmatpush1.msra.mxu0 0.0
    %60 = vmatprep.subr.mxu0 0.0
    %61 = vmatpush1.msra.mxu0 0.0
    %62 = vmatprep.subr.mxu0 0.0
    %63 = vmatpush1.msra.mxu0 0.0
    %64 = vmatprep.subr.mxu0 0.0
    %65 = vmatpush1.msra.mxu0 0.0
    %66 = vmatprep.subr.mxu0 0.0
    %67 = vmatpush1.msra.mxu0 0.0
    %68 = vmatprep.subr.mxu0 0.0
    %69 = vmatpush1.msra.mxu0 0.0
    %70 = vmatprep.subr.mxu0 0.0
    %71 = vmatpush1.msra.mxu0 0.0
    %72 = vmatprep.subr.mxu0 0.0
    %73 = vmatpush1.msra.mxu0 0.0
    %74 = vmatprep.subr.mxu0 0.0
    %75 = vmatpush1.msra.mxu0 0.0
    %76 = vmatprep.subr.mxu0 0.0
    %77 = vmatpush1.msra.mxu0 0.0
    %78 = vmatprep.subr.mxu0 0.0
    %79 = vmatpush1.msra.mxu0 0.0
    %80 = vmatprep.subr.mxu0 0.0
    %81 = vmatpush1.msra.mxu0 0.0
    %82 = vmatprep.subr.mxu0 0.0
    %83 = vmatpush1.msra.mxu0 0.0
    %84 = vmatprep.subr.mxu0 0.0
    %85 = vmatpush1.msra.mxu0 0.0
    %86 = vmatprep.subr.mxu0 0.0
    %87 = vmatpush1.msra.mxu0 0.0
    %88 = vmatprep.subr.mxu0 0.0
    %89 = vmatpush1.msra.mxu0 0.0
    %90 = vmatprep.subr.mxu0 0.0
    %91 = vmatpush1.msra.mxu0 0.0
    %92 = vmatprep.subr.mxu0 0.0
    %93 = vmatpush1.msra.mxu0 0.0
    %94 = vmatprep.subr.mxu0 0.0
    %95 = vmatpush1.msra.mxu0 0.0
    %96 = vmatprep.subr.mxu0 0.0
    %97 = vmatpush1.msra.mxu0 0.0
    %98 = vmatprep.subr.mxu0 0.0
    %99 = vmatpush1.msra.mxu0 0.0
    %100 = vmatprep.mubr.f32.mxu0 0.0
    %101 = vmatmul.mubr.f32.gmra.mrb[0].mxu0 %v34
    %v102 = vpop.f32.mrb[0].mxu0
    %v103 = vadd.f32 0.0, %v102
    %v104 = vpop.f32.mrb[0].mxu0
    %105 = vdwg.mxu0
    %v107 = vsel %vm32, %v22, 0
    %109 = vmatprep.subr.mxu0 0.0
    %110 = vmatpush1.msra.mxu0 %v23
    %111 = vmatprep.subr.mxu0 0.0
    %112 = vmatpush1.msra.mxu0 %v24
    %113 = vmatprep.subr.mxu0 0.0
    %114 = vmatpush1.msra.mxu0 %v25
    %115 = vmatprep.subr.mxu0 0.0
    %116 = vmatpush1.msra.mxu0 %v26
    %117 = vmatprep.subr.mxu0 0.0
    %118 = vmatpush1.msra.mxu0 0.0
    %119 = vmatprep.subr.mxu0 0.0
    %120 = vmatpush1.msra.mxu0 0.0
    %121 = vmatprep.subr.mxu0 0.0
    %122 = vmatpush1.msra.mxu0 0.0
    %123 = vmatprep.subr.mxu0 0.0
    %124 = vmatpush1.msra.mxu0 0.0
    %125 = vmatprep.subr.mxu0 0.0
    %126 = vmatpush1.msra.mxu0 0.0
    %127 = vmatprep.subr.mxu0 0.0
    %128 = vmatpush1.msra.mxu0 0.0
    %129 = vmatprep.subr.mxu0 0.0
    %130 = vmatpush1.msra.mxu0 0.0
    %131 = vmatprep.subr.mxu0 0.0
    %132 = vmatpush1.msra.mxu0 0.0
    %133 = vmatprep.subr.mxu0 0.0
    %134 = vmatpush1.msra.mxu0 0.0
    %135 = vmatprep.subr.mxu0 0.0
    %136 = vmatpush1.msra.mxu0 0.0
    %137 = vmatprep.subr.mxu0 0.0
    %138 = vmatpush1.msra.mxu0 0.0
    %139 = vmatprep.subr.mxu0 0.0
    %140 = vmatpush1.msra.mxu0 0.0
    %141 = vmatprep.subr.mxu0 0.0
    %142 = vmatpush1.msra.mxu0 0.0
    %143 = vmatprep.subr.mxu0 0.0
    %144 = vmatpush1.msra.mxu0 0.0
    %145 = vmatprep.subr.mxu0 0.0
    %146 = vmatpush1.msra.mxu0 0.0
    %147 = vmatprep.subr.mxu0 0.0
    %148 = vmatpush1.msra.mxu0 0.0
    %149 = vmatprep.subr.mxu0 0.0
    %150 = vmatpush1.msra.mxu0 0.0
    %151 = vmatprep.subr.mxu0 0.0
    %152 = vmatpush1.msra.mxu0 0.0
    %153 = vmatprep.subr.mxu0 0.0
    %154 = vmatpush1.msra.mxu0 0.0
    %155 = vmatprep.subr.mxu0 0.0
    %156 = vmatpush1.msra.mxu0 0.0
    %157 = vmatprep.subr.mxu0 0.0
    %158 = vmatpush1.msra.mxu0 0.0
    %159 = vmatprep.subr.mxu0 0.0
    %160 = vmatpush1.msra.mxu0 0.0
    %161 = vmatprep.subr.mxu0 0.0
    %162 = vmatpush1.msra.mxu0 0.0
    %163 = vmatprep.subr.mxu0 0.0
    %164 = vmatpush1.msra.mxu0 0.0
    %165 = vmatprep.subr.mxu0 0.0
    %166 = vmatpush1.msra.mxu0 0.0
    %167 = vmatprep.subr.mxu0 0.0
    %168 = vmatpush1.msra.mxu0 0.0
    %169 = vmatprep.subr.mxu0 0.0
    %170 = vmatpush1.msra.mxu0 0.0
    %171 = vmatprep.subr.mxu0 0.0
    %172 = vmatpush1.msra.mxu0 0.0
    %173 = vmatprep.mubr.f32.mxu0 0.0
    %174 = vmatmul.mubr.f32.gmra.mrb[0].mxu0 %v107
    %v175 = vpop.f32.mrb[0].mxu0
    %v176 = vadd.f32 %v103, %v175
    %v177 = vpop.f32.mrb[0].mxu0
    %178 = vdwg.mxu0
    %v179 = vlaneseq
    %v180 = vshrl.u32 %v179, 7
    %v181 = vsub.s32 0, %v180
    %v182 = vrot.slane %v21, %v181
    %v183 = vadd.f32 %v176, %v182
    %v184 = vmul.f32 %v183, 0.5
    %v185 = vmul.f32 %v183, 0.70710677
    %v186 = verf.f32.pop %v185
    %v187 = vadd.f32 %v186, 1.0
    %v188 = vmul.f32 %v184, %v187
    %vm189 = vcmask 254976
    %v190 = vsel %vm189, %v188, 0.0
    %191 = vadd.xlane.f32.xlu0 %v190
    %v192 = vpop.xlane.xlu0 %191
    %v193 = vrcp.pop 32.0
    %v194 = vmul.f32 %v192, %v193
    %v195 = vsub.f32 %v188, %v194
    %v196 = vmul.f32 %v195, %v195
    %v197 = vsel %vm189, %v196, 0.0
    %198 = vadd.xlane.f32.xlu0 %v197
    %v199 = vpop.xlane.xlu0 %198
    %v200 = vmul.f32 %v199, %v193
    %v201 = vadd.f32 %v200, 1e-12
    %v202 = vrsqrt.pop %v201
    %v203 = vlaneseq
    %v204 = vshrl.u32 %v203, 7
    %v205 = vsub.s32 1, %v204
    %v206 = vrot.slane %v21, %v205
    %v207 = vmul.f32 %v206, %v202
    %v208 = vmul.f32 %v195, %v207
    %v209 = vlaneseq
    %v210 = vshrl.u32 %v209, 7
    %v211 = vsub.s32 2, %v210
    %v212 = vrot.slane %v21, %v211
    %v213 = vadd.f32 %v208, %v212
    %214 = vst.msk [vmem:[#allocation2] sm:$0x3] %vm189, %v213
    // Predicated region
    $region22: #{_ab_embed_impl.3} parent=1 // pred_check
      _
    $region23: #{_ab_embed_impl.3} parent=1 // pred_check_branch
      %216 = sbr.rel (0) target = $region25
    $region24: #{_ab_embed_impl.3} parent=1 // pred_region
      %s218 = ssub.s32 32, 32
      %219 = vsyncadd [#allocation3], %s218
      %s221 = sshll.u32 [#allocation2], 4
      %s222 = int_to_ptr.vmem [resolvable:$true] %s221
      %224 = dma.vmem_to_hbm [thread:$0]  %s222, 32, %s5, [#allocation3]
    $region25: #{_ab_embed_impl.3} parent=1 // pred_fallthru
      _
    // Predicated region
    $region26: #{_ab_embed_impl.3} parent=1 // pred_check
      _
    $region27: #{_ab_embed_impl.3} parent=1 // pred_check_branch
      %226 = sbr.rel (0) target = $region29
    $region28: #{_ab_embed_impl.3} parent=1 // pred_region
      %227 = dma.done [#allocation3], 32
    $region29: #{_ab_embed_impl.3} parent=1 // pred_fallthru
      _
    %228 = vsyncpa [#allocation3], 1

// kernel: _ab_embed_impl.2
$region0: #{_ab_embed_impl.2}
  #allocation0 [shape = 'u32[]', space=smem, size = 0x4, offset = 0x4, fixed_abs, tag = 'smem constant byte address 0x4 - core index']
  #allocation1 [shape = 'u32[144,128]{1,0:T(1,128)}', space=vmem, size = 0x12000, scoped, tag = 'internal scratch']
  %s0 = inlined_call_operand.vmem [shape: f32[16,32], index: 0, kind: input, shape index: {}]
  %s1 = inlined_call_operand.vmem [shape: f32[16,32], index: 1, kind: input, shape index: {}]
  %s2 = inlined_call_operand.vmem [shape: f32[32,32], index: 2, kind: input, shape index: {}]
  %s3 = inlined_call_operand.vmem [shape: f32[3,32], index: 3, kind: input, shape index: {}]
  %s4 = inlined_call_operand.hbm [shape: f32[16,32], index: 4, kind: output, shape index: {0}]
  %s5 = inlined_call_operand.hbm [shape: f32[16,32], index: 5, kind: output, shape index: {1}]
  %6 = xla_tuple %s4, %s5
  %s7 = sld [smem:[#allocation0]]
  $region34: #{_ab_embed_impl.2} parent=0
    _
  %s9 = ssub.s32 1, %s7
  %s10 = scalar_select 0, %s9, %s7
  $region1: #{_ab_embed_impl.2} parent=0
    #allocation2 [shape = 'u8[8192]{0}', space=vmem, size = 0x2000, scoped, tag = 'output window, operand 0, single buffered']
    #allocation3 [shape = 's32[1]{0}', space=sflag, size = 0x4, scoped, tag = 'scoped memory for _ab_embed_impl.2']
    #allocation4 [shape = 'u8[8192]{0}', space=vmem, size = 0x2000, scoped, tag = 'output window, operand 1, single buffered']
    #allocation5 [shape = 's32[1]{0}', space=sflag, size = 0x4, scoped, tag = 'scoped memory for _ab_embed_impl.2']
    %11 = vsyncpa [#allocation3], 0
    %12 = vsyncpa [#allocation5], 0
    // Predicated region
    $region2: #{_ab_embed_impl.2} parent=1 // pred_check
      _
    $region3: #{_ab_embed_impl.2} parent=1 // pred_check_branch
      %14 = sbr.rel (0) target = $region5
    $region4: #{_ab_embed_impl.2} parent=1 // pred_region
      _
    $region5: #{_ab_embed_impl.2} parent=1 // pred_fallthru
      _
    // Predicated region
    $region6: #{_ab_embed_impl.2} parent=1 // pred_check
      _
    $region7: #{_ab_embed_impl.2} parent=1 // pred_check_branch
      %16 = sbr.rel (0) target = $region9
    $region8: #{_ab_embed_impl.2} parent=1 // pred_region
      _
    $region9: #{_ab_embed_impl.2} parent=1 // pred_fallthru
      _
    // Predicated region
    $region10: #{_ab_embed_impl.2} parent=1 // pred_check
      _
    $region11: #{_ab_embed_impl.2} parent=1 // pred_check_branch
      %18 = sbr.rel (0) target = $region13
    $region12: #{_ab_embed_impl.2} parent=1 // pred_region
      _
    $region13: #{_ab_embed_impl.2} parent=1 // pred_fallthru
      _
    // Predicated region
    $region14: #{_ab_embed_impl.2} parent=1 // pred_check
      _
    $region15: #{_ab_embed_impl.2} parent=1 // pred_check_branch
      %20 = sbr.rel (0) target = $region17
    $region16: #{_ab_embed_impl.2} parent=1 // pred_region
      _
    $region17: #{_ab_embed_impl.2} parent=1 // pred_fallthru
      _
    %v21 = vld [vmem:[%s3] sm:$0x7]
    %v22 = vld [vmem:[%s0] sm:$0xff]
    %v23 = vld [vmem:[%s0 + $0x8] sm:$0xff]
    %v24 = vld [vmem:[%s2] sm:$0xff]
    %v25 = vld [vmem:[%s2 + $0x8] sm:$0xff]
    %v26 = vld [vmem:[%s2 + $0x10] sm:$0xff]
    %v27 = vld [vmem:[%s2 + $0x18] sm:$0xff]
    %v28 = vlaneseq
    %v29 = vshrl.u32 %v28, 7
    %v30 = vsub.s32 0, %v29
    %v31 = vrot.slane %v21, %v30
    %vm32 = vcmask 261120
    %v34 = vsel %vm32, %v22, 0
    %v37 = vsel %vm32, %v23, 0
    %39 = vmatprep.subr.mxu0 0.0
    %40 = vmatpush1.msra.mxu0 %v24
    %41 = vmatprep.subr.mxu0 0.0
    %42 = vmatpush1.msra.mxu0 %v25
    %43 = vmatprep.subr.mxu0 0.0
    %44 = vmatpush1.msra.mxu0 %v26
    %45 = vmatprep.subr.mxu0 0.0
    %46 = vmatpush1.msra.mxu0 %v27
    %47 = vmatprep.subr.mxu0 0.0
    %48 = vmatpush1.msra.mxu0 0.0
    %49 = vmatprep.subr.mxu0 0.0
    %50 = vmatpush1.msra.mxu0 0.0
    %51 = vmatprep.subr.mxu0 0.0
    %52 = vmatpush1.msra.mxu0 0.0
    %53 = vmatprep.subr.mxu0 0.0
    %54 = vmatpush1.msra.mxu0 0.0
    %55 = vmatprep.subr.mxu0 0.0
    %56 = vmatpush1.msra.mxu0 0.0
    %57 = vmatprep.subr.mxu0 0.0
    %58 = vmatpush1.msra.mxu0 0.0
    %59 = vmatprep.subr.mxu0 0.0
    %60 = vmatpush1.msra.mxu0 0.0
    %61 = vmatprep.subr.mxu0 0.0
    %62 = vmatpush1.msra.mxu0 0.0
    %63 = vmatprep.subr.mxu0 0.0
    %64 = vmatpush1.msra.mxu0 0.0
    %65 = vmatprep.subr.mxu0 0.0
    %66 = vmatpush1.msra.mxu0 0.0
    %67 = vmatprep.subr.mxu0 0.0
    %68 = vmatpush1.msra.mxu0 0.0
    %69 = vmatprep.subr.mxu0 0.0
    %70 = vmatpush1.msra.mxu0 0.0
    %71 = vmatprep.subr.mxu0 0.0
    %72 = vmatpush1.msra.mxu0 0.0
    %73 = vmatprep.subr.mxu0 0.0
    %74 = vmatpush1.msra.mxu0 0.0
    %75 = vmatprep.subr.mxu0 0.0
    %76 = vmatpush1.msra.mxu0 0.0
    %77 = vmatprep.subr.mxu0 0.0
    %78 = vmatpush1.msra.mxu0 0.0
    %79 = vmatprep.subr.mxu0 0.0
    %80 = vmatpush1.msra.mxu0 0.0
    %81 = vmatprep.subr.mxu0 0.0
    %82 = vmatpush1.msra.mxu0 0.0
    %83 = vmatprep.subr.mxu0 0.0
    %84 = vmatpush1.msra.mxu0 0.0
    %85 = vmatprep.subr.mxu0 0.0
    %86 = vmatpush1.msra.mxu0 0.0
    %87 = vmatprep.subr.mxu0 0.0
    %88 = vmatpush1.msra.mxu0 0.0
    %89 = vmatprep.subr.mxu0 0.0
    %90 = vmatpush1.msra.mxu0 0.0
    %91 = vmatprep.subr.mxu0 0.0
    %92 = vmatpush1.msra.mxu0 0.0
    %93 = vmatprep.subr.mxu0 0.0
    %94 = vmatpush1.msra.mxu0 0.0
    %95 = vmatprep.subr.mxu0 0.0
    %96 = vmatpush1.msra.mxu0 0.0
    %97 = vmatprep.subr.mxu0 0.0
    %98 = vmatpush1.msra.mxu0 0.0
    %99 = vmatprep.subr.mxu0 0.0
    %100 = vmatpush1.msra.mxu0 0.0
    %101 = vmatprep.subr.mxu0 0.0
    %102 = vmatpush1.msra.mxu0 0.0
    %103 = vmatprep.mubr.f32.mxu0 0.0
    %104 = vmatmul.mubr.f32.gmra.mrb[0].mxu0 %v34
    %v105 = vpop.f32.mrb[0].mxu0
    %v106 = vadd.f32 %v31, %v105
    %v107 = vpop.f32.mrb[0].mxu0
    %108 = vmatprep.mubr.f32.mxu0 0.0
    %109 = vmatmul.mubr.f32.gmra.mrb[0].mxu0 %v37
    %v110 = vpop.f32.mrb[0].mxu0
    %v111 = vadd.f32 %v31, %v110
    %v112 = vpop.f32.mrb[0].mxu0
    %113 = vdwg.mxu0
    %v114 = vmul.f32 %v106, 0.5
    %v115 = vmul.f32 %v111, 0.5
    %v116 = vmul.f32 %v106, 0.70710677
    %v117 = vmul.f32 %v111, 0.70710677
    %v118 = verf.f32.pop %v116
    %v119 = verf.f32.pop %v117
    %v120 = vadd.f32 %v118, 1.0
    %v121 = vadd.f32 %v119, 1.0
    %v122 = vmul.f32 %v114, %v120
    %v123 = vmul.f32 %v115, %v121
    %v124 = vsel %vm32, %v122, 0.0
    %125 = vadd.xlane.f32.xlu0 %v124
    %v126 = vpop.xlane.xlu0 %125
    %v127 = vsel %vm32, %v123, 0.0
    %128 = vadd.xlane.f32.xlu0 %v127
    %v129 = vpop.xlane.xlu0 %128
    %v130 = vrcp.pop 32.0
    %v131 = vmul.f32 %v126, %v130
    %v132 = vmul.f32 %v129, %v130
    %v133 = vsub.f32 %v122, %v131
    %v134 = vsub.f32 %v123, %v132
    %v135 = vmul.f32 %v133, %v133
    %v136 = vmul.f32 %v134, %v134
    %v137 = vsel %vm32, %v135, 0.0
    %138 = vadd.xlane.f32.xlu0 %v137
    %v139 = vpop.xlane.xlu0 %138
    %v140 = vsel %vm32, %v136, 0.0
    %141 = vadd.xlane.f32.xlu0 %v140
    %v142 = vpop.xlane.xlu0 %141
    %v143 = vmul.f32 %v139, %v130
    %v144 = vmul.f32 %v142, %v130
    %v145 = vadd.f32 %v143, 1e-12
    %v146 = vadd.f32 %v144, 1e-12
    %v147 = vrsqrt.pop %v145
    %v148 = vrsqrt.pop %v146
    %v149 = vlaneseq
    %v150 = vshrl.u32 %v149, 7
    %v151 = vsub.s32 1, %v150
    %v152 = vrot.slane %v21, %v151
    %v153 = vmul.f32 %v152, %v147
    %v154 = vmul.f32 %v152, %v148
    %v155 = vmul.f32 %v133, %v153
    %v156 = vmul.f32 %v134, %v154
    %v157 = vlaneseq
    %v158 = vshrl.u32 %v157, 7
    %v159 = vsub.s32 2, %v158
    %v160 = vrot.slane %v21, %v159
    %v161 = vadd.f32 %v155, %v160
    %v162 = vadd.f32 %v156, %v160
    %163 = vst.msk [vmem:[#allocation2] sm:$0xff] %vm32, %v161
    %164 = vst.msk [vmem:[#allocation2 + $0x8] sm:$0xff] %vm32, %v162
    %v165 = vld [vmem:[%s1] sm:$0xff]
    %v166 = vld [vmem:[%s1 + $0x8] sm:$0xff]
    %v167 = vld [vmem:[%s2] sm:$0xff]
    %v168 = vld [vmem:[%s2 + $0x8] sm:$0xff]
    %v169 = vld [vmem:[%s2 + $0x10] sm:$0xff]
    %v170 = vld [vmem:[%s2 + $0x18] sm:$0xff]
    %v172 = vsel %vm32, %v165, 0
    %v175 = vsel %vm32, %v166, 0
    %177 = vmatprep.subr.mxu0 0.0
    %178 = vmatpush1.msra.mxu0 %v167
    %179 = vmatprep.subr.mxu0 0.0
    %180 = vmatpush1.msra.mxu0 %v168
    %181 = vmatprep.subr.mxu0 0.0
    %182 = vmatpush1.msra.mxu0 %v169
    %183 = vmatprep.subr.mxu0 0.0
    %184 = vmatpush1.msra.mxu0 %v170
    %185 = vmatprep.subr.mxu0 0.0
    %186 = vmatpush1.msra.mxu0 0.0
    %187 = vmatprep.subr.mxu0 0.0
    %188 = vmatpush1.msra.mxu0 0.0
    %189 = vmatprep.subr.mxu0 0.0
    %190 = vmatpush1.msra.mxu0 0.0
    %191 = vmatprep.subr.mxu0 0.0
    %192 = vmatpush1.msra.mxu0 0.0
    %193 = vmatprep.subr.mxu0 0.0
    %194 = vmatpush1.msra.mxu0 0.0
    %195 = vmatprep.subr.mxu0 0.0
    %196 = vmatpush1.msra.mxu0 0.0
    %197 = vmatprep.subr.mxu0 0.0
    %198 = vmatpush1.msra.mxu0 0.0
    %199 = vmatprep.subr.mxu0 0.0
    %200 = vmatpush1.msra.mxu0 0.0
    %201 = vmatprep.subr.mxu0 0.0
    %202 = vmatpush1.msra.mxu0 0.0
    %203 = vmatprep.subr.mxu0 0.0
    %204 = vmatpush1.msra.mxu0 0.0
    %205 = vmatprep.subr.mxu0 0.0
    %206 = vmatpush1.msra.mxu0 0.0
    %207 = vmatprep.subr.mxu0 0.0
    %208 = vmatpush1.msra.mxu0 0.0
    %209 = vmatprep.subr.mxu0 0.0
    %210 = vmatpush1.msra.mxu0 0.0
    %211 = vmatprep.subr.mxu0 0.0
    %212 = vmatpush1.msra.mxu0 0.0
    %213 = vmatprep.subr.mxu0 0.0
    %214 = vmatpush1.msra.mxu0 0.0
    %215 = vmatprep.subr.mxu0 0.0
    %216 = vmatpush1.msra.mxu0 0.0
    %217 = vmatprep.subr.mxu0 0.0
    %218 = vmatpush1.msra.mxu0 0.0
    %219 = vmatprep.subr.mxu0 0.0
    %220 = vmatpush1.msra.mxu0 0.0
    %221 = vmatprep.subr.mxu0 0.0
    %222 = vmatpush1.msra.mxu0 0.0
    %223 = vmatprep.subr.mxu0 0.0
    %224 = vmatpush1.msra.mxu0 0.0
    %225 = vmatprep.subr.mxu0 0.0
    %226 = vmatpush1.msra.mxu0 0.0
    %227 = vmatprep.subr.mxu0 0.0
    %228 = vmatpush1.msra.mxu0 0.0
    %229 = vmatprep.subr.mxu0 0.0
    %230 = vmatpush1.msra.mxu0 0.0
    %231 = vmatprep.subr.mxu0 0.0
    %232 = vmatpush1.msra.mxu0 0.0
    %233 = vmatprep.subr.mxu0 0.0
    %234 = vmatpush1.msra.mxu0 0.0
    %235 = vmatprep.subr.mxu0 0.0
    %236 = vmatpush1.msra.mxu0 0.0
    %237 = vmatprep.subr.mxu0 0.0
    %238 = vmatpush1.msra.mxu0 0.0
    %239 = vmatprep.subr.mxu0 0.0
    %240 = vmatpush1.msra.mxu0 0.0
    %241 = vmatprep.mubr.f32.mxu0 0.0
    %242 = vmatmul.mubr.f32.gmra.mrb[0].mxu0 %v172
    %v243 = vpop.f32.mrb[0].mxu0
    %v244 = vadd.f32 %v31, %v243
    %v245 = vpop.f32.mrb[0].mxu0
    %246 = vmatprep.mubr.f32.mxu0 0.0
    %247 = vmatmul.mubr.f32.gmra.mrb[0].mxu0 %v175
    %v248 = vpop.f32.mrb[0].mxu0
    %v249 = vadd.f32 %v31, %v248
    %v250 = vpop.f32.mrb[0].mxu0
    %251 = vdwg.mxu0
    %v252 = vmul.f32 %v244, 0.5
    %v253 = vmul.f32 %v249, 0.5
    %v254 = vmul.f32 %v244, 0.70710677
    %v255 = vmul.f32 %v249, 0.70710677
    %v256 = verf.f32.pop %v254
    %v257 = verf.f32.pop %v255
    %v258 = vadd.f32 %v256, 1.0
    %v259 = vadd.f32 %v257, 1.0
    %v260 = vmul.f32 %v252, %v258
    %v261 = vmul.f32 %v253, %v259
    %v262 = vsel %vm32, %v260, 0.0
    %263 = vadd.xlane.f32.xlu0 %v262
    %v264 = vpop.xlane.xlu0 %263
    %v265 = vsel %vm32, %v261, 0.0
    %266 = vadd.xlane.f32.xlu0 %v265
    %v267 = vpop.xlane.xlu0 %266
    %v268 = vmul.f32 %v264, %v130
    %v269 = vmul.f32 %v267, %v130
    %v270 = vsub.f32 %v260, %v268
    %v271 = vsub.f32 %v261, %v269
    %v272 = vmul.f32 %v270, %v270
    %v273 = vmul.f32 %v271, %v271
    %v274 = vsel %vm32, %v272, 0.0
    %275 = vadd.xlane.f32.xlu0 %v274
    %v276 = vpop.xlane.xlu0 %275
    %v277 = vsel %vm32, %v273, 0.0
    %278 = vadd.xlane.f32.xlu0 %v277
    %v279 = vpop.xlane.xlu0 %278
    %v280 = vmul.f32 %v276, %v130
    %v281 = vmul.f32 %v279, %v130
    %v282 = vadd.f32 %v280, 1e-12
    %v283 = vadd.f32 %v281, 1e-12
    %v284 = vrsqrt.pop %v282
    %v285 = vrsqrt.pop %v283
    %v286 = vmul.f32 %v152, %v284
    %v287 = vmul.f32 %v152, %v285
    %v288 = vmul.f32 %v270, %v286
    %v289 = vmul.f32 %v271, %v287
    %v290 = vadd.f32 %v288, %v160
    %v291 = vadd.f32 %v289, %v160
    %292 = vst.msk [vmem:[#allocation4] sm:$0xff] %vm32, %v290
    %293 = vst.msk [vmem:[#allocation4 + $0x8] sm:$0xff] %vm32, %v291
    // Predicated region
    $region18: #{_ab_embed_impl.2} parent=1 // pred_check
      _
    $region19: #{_ab_embed_impl.2} parent=1 // pred_check_branch
      %295 = sbr.rel (0) target = $region21
    $region20: #{_ab_embed_impl.2} parent=1 // pred_region
      %s297 = ssub.s32 256, 256
      %298 = vsyncadd [#allocation3], %s297
      %s299 = sshll.u32 [#allocation2], 4
      %s300 = int_to_ptr.vmem [resolvable:$true] %s299
      %305 = dma.vmem_to_hbm [thread:$0]  %s300, 256, %s4, [#allocation3], 128, 128, 8
    $region21: #{_ab_embed_impl.2} parent=1 // pred_fallthru
      _
    // Predicated region
    $region22: #{_ab_embed_impl.2} parent=1 // pred_check
      _
    $region23: #{_ab_embed_impl.2} parent=1 // pred_check_branch
      %307 = sbr.rel (0) target = $region25
    $region24: #{_ab_embed_impl.2} parent=1 // pred_region
      %s309 = ssub.s32 256, 256
      %310 = vsyncadd [#allocation5], %s309
      %s311 = sshll.u32 [#allocation4], 4
      %s312 = int_to_ptr.vmem [resolvable:$true] %s311
      %317 = dma.vmem_to_hbm [thread:$0]  %s312, 256, %s5, [#allocation5], 128, 128, 8
    $region25: #{_ab_embed_impl.2} parent=1 // pred_fallthru
      _
    // Predicated region
    $region26: #{_ab_embed_impl.2} parent=1 // pred_check
      _
    $region27: #{_ab_embed_impl.2} parent=1 // pred_check_branch
      %319 = sbr.rel (0) target = $region29
    $region28: #{_ab_embed_impl.2} parent=1 // pred_region
      %320 = dma.done [#allocation3], 256
    $region29: #{_ab_embed_impl.2} parent=1 // pred_fallthru
      _
    // Predicated region
    $region30: #{_ab_embed_impl.2} parent=1 // pred_check
      _
    $region31: #{_ab_embed_impl.2} parent=1 // pred_check_branch
      %322 = sbr.rel (0) target = $region33
    $region32: #{_ab_embed_impl.2} parent=1 // pred_region
      %323 = dma.done [#allocation5], 256
    $region33: #{_ab_embed_impl.2} parent=1 // pred_fallthru
      _
    %324 = vsyncpa [#allocation3], 1
    %325 = vsyncpa [#allocation5], 1

</llo_original>
